<compile_context>
chip_gen: v6e
topology: v6e:2x2x1
jax: 0.10.0
libtpu: 0.0.40
codegen_flags: <defaults>
</compile_context>

<pallas_src>
import jax
import jax.numpy as jnp
from jax.experimental import pallas as pl
from jax.experimental.pallas import tpu as pltpu

FILTER_ORDER = 6          # module default
LANES = 128
SUBLANES = 8
# 'smooth' init coefficients from filter_patterns (order+1 = 7 entries)
SMOOTH_COEFFS = (1.0, -0.5, 0.1, -0.02, 0.004, -0.0008, 0.00015)

assert FILTER_ORDER >= 2


def _round_up(a, b):
    return ((a + b - 1) // b) * b


def _chebyshev_response(t, coeffs):
    """sum_k coeffs[k] * T_k(t); T0 never materialized; 2*t hoisted once."""
    two_t = t + t                              # hoisted (don't rely on CSE)
    resp = coeffs[0] + coeffs[1] * t           # c0*T0 + c1*T1
    t_prev = t                                 # T1
    t_curr = two_t * t - 1.0                   # T2
    resp = resp + coeffs[2] * t_curr
    for k in range(3, FILTER_ORDER + 1):
        t_next = two_t * t_curr - t_prev
        resp = resp + coeffs[k] * t_next
        t_prev, t_curr = t_curr, t_next
    return resp


def _sigmoid_plus_eps(resp):
    # sigmoid(x) + 1e-6 == 0.5*tanh(0.5*x) + (0.5 + 1e-6); tanh lives on the
    # EUP slot and avoids the f32 divide of 1/(1+exp(-x)) on the VALU.
    return 0.5 * jnp.tanh(0.5 * resp) + (0.5 + 1e-6)


def _filter_kernel_single(params_ref, x_ref, o_ref):
    # params (SMEM, f32[(order+1)+2]): [c0..c6, scale, shift]
    x = x_ref[...]                               # (rows, 128) f32, pad = -inf
    max_eig = jnp.max(x) + 1e-8                  # -inf padding never wins
    two_over_max = 2.0 / max_eig                 # single scalar divide
    scale = params_ref[FILTER_ORDER + 1]
    shift = params_ref[FILTER_ORDER + 2]
    t = jnp.clip(scale * (x * two_over_max - 1.0) + shift, -0.99, 0.99)
    coeffs = [params_ref[k] for k in range(FILTER_ORDER + 1)]
    o_ref[...] = _sigmoid_plus_eps(_chebyshev_response(t, coeffs))


def _filter_kernel_grid(params_ref, x_ref, o_ref):
    # params (SMEM prefetch, f32[(order+1)+3]): [c0..c6, scale, shift, 2/max]
    scale = params_ref[FILTER_ORDER + 1]
    shift = params_ref[FILTER_ORDER + 2]
    two_over_max = params_ref[FILTER_ORDER + 3]
    x = x_ref[...]                               # (block_rows, 128) f32
    t = jnp.clip(scale * (x * two_over_max - 1.0) + shift, -0.99, 0.99)
    coeffs = [params_ref[k] for k in range(FILTER_ORDER + 1)]
    o_ref[...] = _sigmoid_plus_eps(_chebyshev_response(t, coeffs))


def universal_polynomial_filter(eigenvalues, coefficients, domain_scale,
                                domain_shift, *, block_rows=2048,
                                single_tile_max_rows=512):
    """Chebyshev UniversalPolynomialFilter forward. eigenvalues: (N,) -> (N,)."""
    n = eigenvalues.shape[0]
    eig = eigenvalues.astype(jnp.float32)
    coeffs = coefficients.astype(jnp.float32).reshape(FILTER_ORDER + 1)

    # Scalar parameter transforms (same as the PyTorch forward); these fuse
    # into the tiny param-pack HLO around the call.
    scale = (jnp.abs(domain_scale) + 0.1).astype(jnp.float32)
    shift = jnp.tanh(domain_shift).astype(jnp.float32)

    rows = max(SUBLANES, _round_up(pl.cdiv(n, LANES), SUBLANES))
    n_pad = rows * LANES

    if rows <= single_tile_max_rows:
        # Small/medium N: one sublane-dense tile, global max stays in-kernel.
        if n_pad > n:
            x2d = jnp.concatenate(
                [eig, jnp.full((n_pad - n,), -jnp.inf, dtype=jnp.float32)]
            ).reshape(rows, LANES)
        else:
            x2d = eig.reshape(rows, LANES)       # free reshape, no pad copy
        params = jnp.concatenate([coeffs, scale.reshape(1), shift.reshape(1)])
        out = pl.pallas_call(
            _filter_kernel_single,
            out_shape=jax.ShapeDtypeStruct((rows, LANES), jnp.float32),
            in_specs=[pl.BlockSpec(memory_space=pltpu.MemorySpace.SMEM),
                      pl.BlockSpec(memory_space=pltpu.MemorySpace.VMEM)],
            out_specs=pl.BlockSpec(memory_space=pltpu.MemorySpace.VMEM),
        )(params, x2d)
    else:
        # Large N: gridded, pipelined path. The global max must be computed
        # outside the kernel once the array is split across grid steps, so
        # 2/max is reduced once in the wrapper and passed via scalar prefetch.
        if n_pad > n:
            # Pad with 0.0 (max already computed globally in the wrapper) --
            # pad is at most 1023 elements; never rounded up to block_rows.
            x2d = jnp.concatenate(
                [eig, jnp.zeros((n_pad - n,), dtype=jnp.float32)]
            ).reshape(rows, LANES)
        else:
            x2d = eig.reshape(rows, LANES)       # free reshape, no pad copy
        two_over_max = (2.0 / (jnp.max(eig) + 1e-8)).astype(jnp.float32)
        params = jnp.concatenate(
            [coeffs, scale.reshape(1), shift.reshape(1),
             two_over_max.reshape(1)])
        # Cap block_rows so the grid has >= 2 blocks (v7x megacore sharding),
        # Pallas handles the ragged final block.
        br = min(max(SUBLANES, _round_up(block_rows, SUBLANES)),
                 max(SUBLANES, _round_up(pl.cdiv(rows, 2), SUBLANES)))
        grid = (pl.cdiv(rows, br),)
        out = pl.pallas_call(
            _filter_kernel_grid,
            out_shape=jax.ShapeDtypeStruct((rows, LANES), jnp.float32),
            grid_spec=pltpu.PrefetchScalarGridSpec(
                num_scalar_prefetch=1, grid=grid,
                in_specs=[pl.BlockSpec((br, LANES), lambda i, p: (i, 0))],
                out_specs=pl.BlockSpec((br, LANES), lambda i, p: (i, 0))),
            compiler_params=pltpu.CompilerParams(
                dimension_semantics=("parallel",)),
            cost_estimate=pl.CostEstimate(
                flops=25 * n_pad, transcendentals=n_pad,
                bytes_accessed=8 * n_pad),
        )(params, x2d)

    flat = out.reshape(-1)
    return flat if n_pad == n else flat[:n]


def _reference(eigenvalues, coefficients, domain_scale, domain_shift):
    """Pure-JAX mirror of the PyTorch forward (chebyshev, sigmoid response)."""
    scale = jnp.abs(domain_scale) + 0.1
    shift = jnp.tanh(domain_shift)
    max_eig = jnp.max(eigenvalues) + 1e-8
    x = 2.0 * (eigenvalues / max_eig) - 1.0
    x = jnp.clip(scale * x + shift, -0.99, 0.99)
    polys = [jnp.ones_like(x), x]
    for _ in range(2, FILTER_ORDER + 1):
        polys.append(2.0 * x * polys[-1] - polys[-2])
    polys = jnp.stack(polys, axis=-1)
    resp = jnp.sum(coefficients * polys, axis=-1)
    return jax.nn.sigmoid(resp) + 1e-6


if __name__ == "__main__":
    # Deterministic parameter init mirroring the PyTorch __init__ defaults.
    coefficients = jnp.asarray(SMOOTH_COEFFS, jnp.float32)     # 'smooth' init
    domain_scale = jnp.asarray(1.0, jnp.float32)
    domain_shift = jnp.asarray(0.0, jnp.float32)

    # Deterministic example eigenvalues (e.g. graph Laplacian spectrum), N=256.
    key = jax.random.PRNGKey(0)
    eigenvalues = jax.random.uniform(key, (256,), dtype=jnp.float32) * 2.0

    out = universal_polynomial_filter(eigenvalues, coefficients,
                                      domain_scale, domain_shift)
    out = jax.block_until_ready(out)
    ref = _reference(eigenvalues, coefficients, domain_scale, domain_shift)
    assert out.shape == eigenvalues.shape
    assert jnp.allclose(out, ref, atol=1e-5, rtol=1e-5), "single-tile mismatch"

    # Exercise the gridded path with a ragged last block (small blocks force
    # a 3-step grid), including the 0-padding + tail slice.
    eig2 = jax.random.uniform(jax.random.PRNGKey(0), (3000,),
                              dtype=jnp.float32) * 4.0
    out2 = universal_polynomial_filter(eig2, coefficients, domain_scale,
                                       domain_shift, block_rows=8,
                                       single_tile_max_rows=8)
    out2 = jax.block_until_ready(out2)
    ref2 = _reference(eig2, coefficients, domain_scale, domain_shift)
    assert out2.shape == eig2.shape
    assert jnp.allclose(out2, ref2, atol=1e-5, rtol=1e-5), "gridded mismatch"

    # Exercise the default thresholds: N large enough to take the gridded
    # path, no padding copy, no output slice (N % 1024 == 0), 2-block grid.
    eig3 = jax.random.uniform(jax.random.PRNGKey(0), (128 * 1024,),
                              dtype=jnp.float32) * 3.0
    out3 = universal_polynomial_filter(eig3, coefficients, domain_scale,
                                       domain_shift)
    out3 = jax.block_until_ready(out3)
    ref3 = _reference(eig3, coefficients, domain_scale, domain_shift)
    assert out3.shape == eig3.shape
    assert jnp.allclose(out3, ref3, atol=1e-5, rtol=1e-5), "default-grid mismatch"

    print("KERNEL_OK")
</pallas_src>

<mosaic_0001>
module attributes {stable_mosaic.version = 11 : i64} {
  func.func @_filter_kernel_single(%arg0: memref<9xf32, #tpu.memory_space<smem>>, %arg1: memref<8x128xf32, #tpu.memory_space<vmem>>, %arg2: memref<8x128xf32, #tpu.memory_space<vmem>>) attributes {dimension_semantics = [], scalar_prefetch = 0 : i64, scratch_operands = 0 : i64, tpu.core_type = #tpu.core_type<tc>} {
    %c0 = arith.constant 0 : index
    %c0_0 = arith.constant 0 : index
    %0 = vector.load %arg1[%c0, %c0_0] : memref<8x128xf32, #tpu.memory_space<vmem>>, vector<8x128xf32>
    %1 = vector.shape_cast %0 : vector<8x128xf32> to vector<1x8x128xf32>
    %cst = arith.constant dense<0xFF800000> : vector<1xf32>
    %2 = vector.multi_reduction <maximumf>, %1, %cst [1, 2] : vector<1x8x128xf32> to vector<1xf32>
    %3 = vector.shape_cast %2 : vector<1xf32> to vector<1x1x1xf32>
    %4 = vector.extract %3[0, 0, 0] : f32 from vector<1x1x1xf32>
    %cst_1 = arith.constant 9.99999993E-9 : f32
    %5 = arith.addf %4, %cst_1 : f32
    %cst_2 = arith.constant 2.000000e+00 : f32
    %6 = arith.divf %cst_2, %5 : f32
    %c7 = arith.constant 7 : index
    %7 = memref.load %arg0[%c7] : memref<9xf32, #tpu.memory_space<smem>>
    %c8 = arith.constant 8 : index
    %8 = memref.load %arg0[%c8] : memref<9xf32, #tpu.memory_space<smem>>
    %9 = vector.broadcast %6 : f32 to vector<8x128xf32>
    %10 = arith.mulf %0, %9 : vector<8x128xf32>
    %cst_3 = arith.constant 1.000000e+00 : f32
    %11 = vector.broadcast %cst_3 : f32 to vector<8x128xf32>
    %12 = arith.subf %10, %11 : vector<8x128xf32>
    %13 = vector.broadcast %7 : f32 to vector<8x128xf32>
    %14 = arith.mulf %13, %12 : vector<8x128xf32>
    %15 = vector.broadcast %8 : f32 to vector<8x128xf32>
    %16 = arith.addf %14, %15 : vector<8x128xf32>
    %cst_4 = arith.constant -9.900000e-01 : f32
    %cst_5 = arith.constant 9.900000e-01 : f32
    %17 = vector.broadcast %cst_4 : f32 to vector<8x128xf32>
    %18 = arith.maximumf %17, %16 : vector<8x128xf32>
    %19 = vector.broadcast %cst_5 : f32 to vector<8x128xf32>
    %20 = arith.minimumf %19, %18 : vector<8x128xf32>
    %c0_6 = arith.constant 0 : index
    %21 = memref.load %arg0[%c0_6] : memref<9xf32, #tpu.memory_space<smem>>
    %c1 = arith.constant 1 : index
    %22 = memref.load %arg0[%c1] : memref<9xf32, #tpu.memory_space<smem>>
    %c2 = arith.constant 2 : index
    %23 = memref.load %arg0[%c2] : memref<9xf32, #tpu.memory_space<smem>>
    %c3 = arith.constant 3 : index
    %24 = memref.load %arg0[%c3] : memref<9xf32, #tpu.memory_space<smem>>
    %c4 = arith.constant 4 : index
    %25 = memref.load %arg0[%c4] : memref<9xf32, #tpu.memory_space<smem>>
    %c5 = arith.constant 5 : index
    %26 = memref.load %arg0[%c5] : memref<9xf32, #tpu.memory_space<smem>>
    %c6 = arith.constant 6 : index
    %27 = memref.load %arg0[%c6] : memref<9xf32, #tpu.memory_space<smem>>
    %28 = arith.addf %20, %20 : vector<8x128xf32>
    %29 = vector.broadcast %22 : f32 to vector<8x128xf32>
    %30 = arith.mulf %29, %20 : vector<8x128xf32>
    %31 = vector.broadcast %21 : f32 to vector<8x128xf32>
    %32 = arith.addf %31, %30 : vector<8x128xf32>
    %33 = arith.mulf %28, %20 : vector<8x128xf32>
    %cst_7 = arith.constant 1.000000e+00 : f32
    %34 = vector.broadcast %cst_7 : f32 to vector<8x128xf32>
    %35 = arith.subf %33, %34 : vector<8x128xf32>
    %36 = vector.broadcast %23 : f32 to vector<8x128xf32>
    %37 = arith.mulf %36, %35 : vector<8x128xf32>
    %38 = arith.addf %32, %37 : vector<8x128xf32>
    %39 = arith.mulf %28, %35 : vector<8x128xf32>
    %40 = arith.subf %39, %20 : vector<8x128xf32>
    %41 = vector.broadcast %24 : f32 to vector<8x128xf32>
    %42 = arith.mulf %41, %40 : vector<8x128xf32>
    %43 = arith.addf %38, %42 : vector<8x128xf32>
    %44 = arith.mulf %28, %40 : vector<8x128xf32>
    %45 = arith.subf %44, %35 : vector<8x128xf32>
    %46 = vector.broadcast %25 : f32 to vector<8x128xf32>
    %47 = arith.mulf %46, %45 : vector<8x128xf32>
    %48 = arith.addf %43, %47 : vector<8x128xf32>
    %49 = arith.mulf %28, %45 : vector<8x128xf32>
    %50 = arith.subf %49, %40 : vector<8x128xf32>
    %51 = vector.broadcast %26 : f32 to vector<8x128xf32>
    %52 = arith.mulf %51, %50 : vector<8x128xf32>
    %53 = arith.addf %48, %52 : vector<8x128xf32>
    %54 = arith.mulf %28, %50 : vector<8x128xf32>
    %55 = arith.subf %54, %45 : vector<8x128xf32>
    %56 = vector.broadcast %27 : f32 to vector<8x128xf32>
    %57 = arith.mulf %56, %55 : vector<8x128xf32>
    %58 = arith.addf %53, %57 : vector<8x128xf32>
    %cst_8 = arith.constant 5.000000e-01 : f32
    %59 = vector.broadcast %cst_8 : f32 to vector<8x128xf32>
    %60 = arith.mulf %59, %58 : vector<8x128xf32>
    %61 = math.tanh %60 : vector<8x128xf32>
    %cst_9 = arith.constant 5.000000e-01 : f32
    %62 = vector.broadcast %cst_9 : f32 to vector<8x128xf32>
    %63 = arith.mulf %62, %61 : vector<8x128xf32>
    %cst_10 = arith.constant 5.000010e-01 : f32
    %64 = vector.broadcast %cst_10 : f32 to vector<8x128xf32>
    %65 = arith.addf %63, %64 : vector<8x128xf32>
    %c0_11 = arith.constant 0 : index
    %c0_12 = arith.constant 0 : index
    %66 = vector.load %arg2[%c0_11, %c0_12] : memref<8x128xf32, #tpu.memory_space<vmem>>, vector<8x128xf32>
    tpu.vector_store %arg2[%c0_11, %c0_12], %65 {strides = array<i32>} : memref<8x128xf32, #tpu.memory_space<vmem>>, vector<8x128xf32>,
    return
  }
}

</mosaic_0001>

<llo_original>
// kernel: tpu_custom_call.1
$region0: #{tpu_custom_call.1}
  #allocation0 [shape = 'u32[]', space=smem, size = 0x4, offset = 0x4, fixed_abs, tag = 'smem constant byte address 0x4 - core index']
  #allocation1 [shape = 'u32[144,128]{1,0:T(1,128)}', space=vmem, size = 0x12000, scoped, tag = 'internal scratch']
  %s0 = inlined_call_operand.hbm [shape: f32[9], index: 0, kind: input, shape index: {}]
  %s1 = inlined_call_operand.hbm [shape: f32[8,128], index: 1, kind: input, shape index: {}]
  %s2 = inlined_call_operand.hbm [shape: f32[8,128], index: 2, kind: output, shape index: {}]
  %s3 = sld [smem:[#allocation0]]
  $region26: #{tpu_custom_call.1} parent=0
    _
  %s5 = ssub.s32 1, %s3
  %s6 = scalar_select 0, %s5, %s3
  $region1: #{tpu_custom_call.1} parent=0
    #allocation2 [shape = 'u8[512]{0}', space=smem, size = 0x200, scoped, tag = 'input window, operand 0, single buffered']
    #allocation3 [shape = 's32[1]{0}', space=sflag, size = 0x4, scoped, tag = 'scoped memory for tpu_custom_call.1']
    #allocation4 [shape = 's32[1]{0}', space=sflag, size = 0x4, scoped, tag = 'scoped memory for tpu_custom_call.1']
    #allocation5 [shape = 's32[1]{0}', space=sflag, size = 0x4, scoped, tag = 'scoped memory for tpu_custom_call.1']
    #allocation6 [shape = 'u8[4096]{0}', space=vmem, size = 0x1000, scoped, tag = 'input window, operand 1, single buffered']
    #allocation7 [shape = 'u8[4096]{0}', space=vmem, size = 0x1000, scoped, tag = 'output window, operand 0, single buffered']
    %7 = vsyncpa [#allocation5], 0
    %8 = vsyncpa [#allocation3], 0
    %9 = vsyncpa [#allocation4], 0
    // Predicated region
    $region2: #{tpu_custom_call.1} parent=1 // pred_check
      _
    $region3: #{tpu_custom_call.1} parent=1 // pred_check_branch
      %11 = sbr.rel (0) target = $region5
    $region4: #{tpu_custom_call.1} parent=1 // pred_region
      %s13 = ssub.s32 16, 16
      %14 = vsyncadd [#allocation5], %s13
      %17 = dma.hbm_to_smem %s0, 16, [#allocation2], [#allocation5]
    $region5: #{tpu_custom_call.1} parent=1 // pred_fallthru
      _
    // Predicated region
    $region6: #{tpu_custom_call.1} parent=1 // pred_check
      _
    $region7: #{tpu_custom_call.1} parent=1 // pred_check_branch
      %19 = sbr.rel (0) target = $region9
    $region8: #{tpu_custom_call.1} parent=1 // pred_region
      %s21 = ssub.s32 128, 128
      %22 = vsyncadd [#allocation3], %s21
      %s24 = sshll.u32 [#allocation6], 4
      %s25 = int_to_ptr.vmem [resolvable:$true] %s24
      %27 = dma.hbm_to_vmem [thread:$0]  %s1, 128, %s25, [#allocation3]
    $region9: #{tpu_custom_call.1} parent=1 // pred_fallthru
      _
    // Predicated region
    $region10: #{tpu_custom_call.1} parent=1 // pred_check
      _
    $region11: #{tpu_custom_call.1} parent=1 // pred_check_branch
      %29 = sbr.rel (0) target = $region13
    $region12: #{tpu_custom_call.1} parent=1 // pred_region
      %30 = dma.done [#allocation5], 16
    $region13: #{tpu_custom_call.1} parent=1 // pred_fallthru
      _
    // Predicated region
    $region14: #{tpu_custom_call.1} parent=1 // pred_check
      _
    $region15: #{tpu_custom_call.1} parent=1 // pred_check_branch
      %32 = sbr.rel (0) target = $region17
    $region16: #{tpu_custom_call.1} parent=1 // pred_region
      %33 = dma.done [#allocation3], 128
    $region17: #{tpu_custom_call.1} parent=1 // pred_fallthru
      _
    %34 = sfence
    %v35 = vld [vmem:[#allocation6] sm:$0xff]
    %36 = vmax.xlane.f32.xlu0 %v35
    %v37 = vpop.xlane.xlu0 %36
    %v38 = vrot.slane %v37, 4
    %v39 = vmax.f32 %v37, %v38
    %v40 = vrot.slane %v39, 2
    %v41 = vmax.f32 %v39, %v40
    %v42 = vrot.slane %v41, 1
    %v43 = vmax.f32 %v41, %v42
    %s44 = vtos %v43
    %s45 = sadd.f32 %s44, 1e-08
    %v46 = vstv %s45
    %v47 = vrcp.pop %v46
    %s48 = vtos %v47
    %s49 = smul.f32 2.0, %s48
    %s50 = sld [smem:[#allocation2 + $0x7]]
    %s51 = sld [smem:[#allocation2 + $0x8]]
    %v52 = vstv %s49
    %v53 = vmul.f32 %v35, %v52
    %v54 = vsub.f32 %v53, 1.0
    %v55 = vstv %s50
    %v56 = vmul.f32 %v55, %v54
    %v57 = vstv %s51
    %v58 = vadd.f32 %v56, %v57
    %v59 = vmax.f32 %v58, -0.99
    %v60 = vmin.f32 %v59, 0.99
    %s61 = sld [smem:[#allocation2]]
    %s62 = sld [smem:[#allocation2 + $0x1]]
    %s63 = sld [smem:[#allocation2 + $0x2]]
    %s64 = sld [smem:[#allocation2 + $0x3]]
    %s65 = sld [smem:[#allocation2 + $0x4]]
    %s66 = sld [smem:[#allocation2 + $0x5]]
    %s67 = sld [smem:[#allocation2 + $0x6]]
    %v68 = vadd.f32 %v60, %v60
    %v69 = vstv %s62
    %v70 = vmul.f32 %v69, %v60
    %v71 = vstv %s61
    %v72 = vadd.f32 %v71, %v70
    %v73 = vmul.f32 %v68, %v60
    %v74 = vsub.f32 %v73, 1.0
    %v75 = vstv %s63
    %v76 = vmul.f32 %v75, %v74
    %v77 = vadd.f32 %v72, %v76
    %v78 = vmul.f32 %v68, %v74
    %v79 = vsub.f32 %v78, %v60
    %v80 = vstv %s64
    %v81 = vmul.f32 %v80, %v79
    %v82 = vadd.f32 %v77, %v81
    %v83 = vmul.f32 %v68, %v79
    %v84 = vsub.f32 %v83, %v74
    %v85 = vstv %s65
    %v86 = vmul.f32 %v85, %v84
    %v87 = vadd.f32 %v82, %v86
    %v88 = vmul.f32 %v68, %v84
    %v89 = vsub.f32 %v88, %v79
    %v90 = vstv %s66
    %v91 = vmul.f32 %v90, %v89
    %v92 = vadd.f32 %v87, %v91
    %v93 = vmul.f32 %v68, %v89
    %v94 = vsub.f32 %v93, %v84
    %v95 = vstv %s67
    %v96 = vmul.f32 %v95, %v94
    %v97 = vadd.f32 %v92, %v96
    %v98 = vmul.f32 %v97, 0.5
    %v99 = vtanh.pop %v98
    %v100 = vmul.f32 %v99, 0.5
    %v101 = vadd.f32 %v100, 0.500001
    %102 = vst [vmem:[#allocation7] sm:$0xff] %v101
    // Predicated region
    $region18: #{tpu_custom_call.1} parent=1 // pred_check
      _
    $region19: #{tpu_custom_call.1} parent=1 // pred_check_branch
      %104 = sbr.rel (0) target = $region21
    $region20: #{tpu_custom_call.1} parent=1 // pred_region
      %s106 = ssub.s32 128, 128
      %107 = vsyncadd [#allocation4], %s106
      %s109 = sshll.u32 [#allocation7], 4
      %s110 = int_to_ptr.vmem [resolvable:$true] %s109
      %112 = dma.vmem_to_hbm [thread:$0]  %s110, 128, %s2, [#allocation4]
    $region21: #{tpu_custom_call.1} parent=1 // pred_fallthru
      _
    // Predicated region
    $region22: #{tpu_custom_call.1} parent=1 // pred_check
      _
    $region23: #{tpu_custom_call.1} parent=1 // pred_check_branch
      %114 = sbr.rel (0) target = $region25
    $region24: #{tpu_custom_call.1} parent=1 // pred_region
      %115 = dma.done [#allocation4], 128
    $region25: #{tpu_custom_call.1} parent=1 // pred_fallthru
      _
    %116 = vsyncpa [#allocation3], 1
    %117 = vsyncpa [#allocation4], 1
    %118 = vsyncpa [#allocation5], 1

</llo_original>
